<compile_context>
chip_gen: v7x
topology: tpu7x:2x2x1
jax: 0.10.0
libtpu: 0.0.40
codegen_flags: <defaults>
</compile_context>

<pallas_src>
import jax
import jax.numpy as jnp
from jax.experimental import pallas as pl
from jax.experimental.pallas import tpu as pltpu

NEG_SLOPE = 0.01     # nn.LeakyReLU default negative_slope
BN_EPS = 1e-5        # nn.BatchNorm2d default eps
LANE_STRIDE = 128    # per-sample lane stride: one (Ho+2)*(Wo+2) canvas padded to a lane tile


def conv_res_block_forward(x_nchw, p0, p1, p2, *, batch_per_step=None):
    """ConvResBlock.forward: y0 = Conv(s=2)(x); out = y0 + Conv(Conv(y0)).

    Params are (w_hwio (3,3,cin,cout), scale (cout,), bias (cout,)) with BatchNorm folded
    into scale/bias (inference semantics).
    """
    # TODO(synk): BatchNorm is folded with inference (running-stat) semantics; PyTorch's
    # default train() mode would use per-batch statistics.  The Dropout declared in Conv is
    # never applied in the PyTorch forward(), so it is omitted here as well.
    w0, s0, b0 = p0
    w1, s1, b1 = p1
    w2, s2, b2 = p2
    N, Cin, H, W = x_nchw.shape
    C = w0.shape[-1]
    assert H % 2 == 0 and W % 2 == 0 and C % 8 == 0
    Ho, Wo = H // 2, W // 2
    Hp, Wp = Ho + 2, Wo + 2
    S = LANE_STRIDE
    assert Hp * Wp <= S, "spatial canvas must fit one lane tile; tile spatially for larger maps"

    if batch_per_step is None:
        # Fold as much batch as possible into one grid step (fewer fixed-overhead steps,
        # wider lane-dense ops).  On v7x pass batch_per_step explicitly so grid = N/nb stays
        # a multiple of 2 and both TensorCores get work.
        batch_per_step = next(nb for nb in range(min(N, 8), 0, -1) if N % nb == 0)
    nb = batch_per_step
    assert N % nb == 0
    Lb = nb * S                                   # lanes per grid step (multiple of 128)

    # ---------------- wrapper-side layout prep (cheap fused XLA transposes/pads) ----------
    # Even/odd phase canvases of the input:
    #   phases[(a*2+b)*Cin + ci, n*S + (i+1)*Wp + (j+1)] = x[n, ci, 2i+a, 2j+b]
    # with zero canvas border and zero tail lanes.
    xr = x_nchw.reshape(N, Cin, Ho, 2, Wo, 2)
    ph = jnp.transpose(xr, (3, 5, 1, 0, 2, 4)).reshape(4 * Cin, N, Ho, Wo)
    ph = jnp.pad(ph, ((0, 0), (0, 0), (1, 1), (1, 1))).reshape(4 * Cin, N, Hp * Wp)
    ph = jnp.pad(ph, ((0, 0), (0, 0), (0, S - Hp * Wp)))
    phases = ph.reshape(4 * Cin, N * S).astype(jnp.bfloat16)

    # Interior-lane mask: 1.0 on valid output positions of each per-sample canvas.
    m2 = jnp.zeros((Hp, Wp), jnp.float32).at[1:Ho + 1, 1:Wo + 1].set(1.0)
    mask = jnp.pad(m2.reshape(1, Hp * Wp), ((0, 0), (0, S - Hp * Wp)))
    mask = jnp.tile(mask, (1, N))                                        # (1, N*S)

    # Weights flattened to (Cout, 9*Cin) with column order (kh, kw, cin); bf16 for the MXU.
    def wmat(w_hwio):
        co = w_hwio.shape[-1]
        return jnp.transpose(w_hwio, (3, 0, 1, 2)).reshape(co, -1).astype(jnp.bfloat16)

    w0m, w1m, w2m = wmat(w0), wmat(w1), wmat(w2)
    scales = jnp.stack([s0, s1, s2]).astype(jnp.float32).reshape(3, C, 1)  # per-sublane affine
    biases = jnp.stack([b0, b1, b2]).astype(jnp.float32).reshape(3, C, 1)

    def kernel(ph_ref, mk_ref, w0_ref, w1_ref, w2_ref, sc_ref, bi_ref, o_ref):
        ph_v = ph_ref[...]                        # (4*Cin, Lb) bf16 phase canvases
        msk = mk_ref[...]                         # (1, Lb) f32 interior mask

        def shift_lanes(v, dd):
            # result[:, p] = v[:, p + dd]; out-of-range lanes read 0.  Shifted-in zeros /
            # neighbour-sample lanes only ever land on border canvas positions, which are
            # masked to zero before feeding the next stage.
            # TODO(synk): sweep pltpu.roll(v, (-dd) % Lb, axis=1) here to put the shift on
            # the XLU slot instead of slice+concat copies.
            if dd == 0:
                return v
            z = jnp.zeros((v.shape[0], abs(dd)), v.dtype)
            if dd > 0:
                return jnp.concatenate([v[:, dd:], z], axis=1)
            return jnp.concatenate([z, v[:, :Lb + dd]], axis=1)

        def bn_lrelu(acc, k):                     # f32 per-channel (per-sublane) affine + LeakyReLU
            y = acc * sc_ref[k] + bi_ref[k]
            return jnp.where(y >= 0.0, y, NEG_SLOPE * y)

        def conv3x3(act_bf16, w_ref, k):
            # 3x3 / stride 1 / pad 1 conv on a zero-bordered canvas: 9 lane-shifted taps
            # stacked along sublanes, one deep-K MXU matmul (v5e/v6e-friendly shape).
            # TODO(synk): on v7x, 9 accumulating K=C matmuls into the MRB avoid the stack.
            taps = [shift_lanes(act_bf16, (kh - 1) * Wp + (kw - 1))
                    for kh in range(3) for kw in range(3)]
            patch = jnp.concatenate(taps, axis=0)                        # (9*C, Lb) bf16
            return bn_lrelu(jnp.dot(w_ref[...], patch,
                                    preferred_element_type=jnp.float32), k)

        # ---- stage 0: 3x3 / stride 2 / pad 1 head conv via even/odd phase canvases ------
        taps0 = []
        for kh in range(3):
            a = 0 if kh == 1 else 1               # input row 2i+kh-1 -> phase row a, shift rs
            rs = -1 if kh == 0 else 0
            for kw in range(3):
                b = 0 if kw == 1 else 1
                cs = -1 if kw == 0 else 0
                slab = ph_v[(a * 2 + b) * Cin:(a * 2 + b + 1) * Cin, :]
                taps0.append(shift_lanes(slab, rs * Wp + cs))
        patch0 = jnp.concatenate(taps0, axis=0)                          # (9*Cin, Lb) bf16
        y0 = bn_lrelu(jnp.dot(w0_ref[...], patch0,
                              preferred_element_type=jnp.float32), 0)
        y0 = y0 * msk                             # zero border lanes (stage-1 input + residual)

        # ---- ResBlock: two stride-1 convs + skip ------------------------------------------
        y1 = conv3x3(y0.astype(jnp.bfloat16), w1_ref, 1) * msk
        y2 = conv3x3(y1.astype(jnp.bfloat16), w2_ref, 2)
        o_ref[...] = y0 + y2                      # border lanes are don't-care; wrapper slices interior

    out_canvas = pl.pallas_call(
        kernel,
        out_shape=jax.ShapeDtypeStruct((C, N * S), jnp.float32),
        grid=(N // nb,),
        in_specs=[
            pl.BlockSpec((4 * Cin, Lb), lambda g: (0, g)),
            pl.BlockSpec((1, Lb), lambda g: (0, g)),
            pl.BlockSpec((C, 9 * Cin), lambda g: (0, 0)),
            pl.BlockSpec((C, 9 * C), lambda g: (0, 0)),
            pl.BlockSpec((C, 9 * C), lambda g: (0, 0)),
            pl.BlockSpec((3, C, 1), lambda g: (0, 0, 0)),
            pl.BlockSpec((3, C, 1), lambda g: (0, 0, 0)),
        ],
        out_specs=pl.BlockSpec((C, Lb), lambda g: (0, g)),
        compiler_params=pltpu.CompilerParams(dimension_semantics=("parallel",)),
    )(phases, mask, w0m, w1m, w2m, scales, biases)

    # Extract the interior of each per-sample canvas and return NCHW.
    oc = out_canvas.reshape(C, N, S)[:, :, :Hp * Wp].reshape(C, N, Hp, Wp)
    return jnp.transpose(oc[:, :, 1:Ho + 1, 1:Wo + 1], (1, 0, 2, 3))


def init_conv_bn_params(key, in_c, out_c):
    """Deterministic synthetic parameters for one Conv(+BN) block, BN folded to scale/bias."""
    kw_, kb_, kg_, kbe_, km_, kv_ = jax.random.split(key, 6)
    w_oihw = 0.1 * jax.random.normal(kw_, (out_c, in_c, 3, 3), jnp.float32)   # PyTorch OIHW
    conv_b = 0.1 * jax.random.normal(kb_, (out_c,), jnp.float32)
    gamma = 1.0 + 0.1 * jax.random.normal(kg_, (out_c,), jnp.float32)
    beta = 0.1 * jax.random.normal(kbe_, (out_c,), jnp.float32)
    run_mean = 0.1 * jax.random.normal(km_, (out_c,), jnp.float32)
    run_var = jnp.abs(1.0 + 0.1 * jax.random.normal(kv_, (out_c,), jnp.float32))

    scale = gamma / jnp.sqrt(run_var + BN_EPS)
    bias = beta + (conv_b - run_mean) * scale
    w_hwio = jnp.transpose(w_oihw, (2, 3, 1, 0))                              # (3,3,Cin,Cout)
    return w_hwio, scale, bias


# --------------------- pure-JAX reference (same bf16 matmul inputs) --------------------------
def _ref_conv_bn_lrelu(x, w_hwio, scale, bias, *, stride):
    N, H, W, Cin = x.shape
    Cout = w_hwio.shape[-1]
    Ho = (H + 2 - 3) // stride + 1
    Wo = (W + 2 - 3) // stride + 1
    xp = jnp.pad(x, ((0, 0), (1, 1), (1, 1), (0, 0))).astype(jnp.bfloat16).astype(jnp.float32)
    wb = w_hwio.astype(jnp.bfloat16).astype(jnp.float32)
    acc = jnp.zeros((N, Ho, Wo, Cout), jnp.float32)
    for kh in range(3):
        for kw in range(3):
            win = xp[:, kh:kh + stride * (Ho - 1) + 1:stride,
                     kw:kw + stride * (Wo - 1) + 1:stride, :]
            acc = acc + jnp.einsum('nhwi,io->nhwo', win, wb[kh, kw],
                                   precision=jax.lax.Precision.HIGHEST)
    y = acc * scale + bias
    return jnp.where(y >= 0, y, NEG_SLOPE * y)


def _reference_forward(x_nchw, p0, p1, p2):
    x = jnp.transpose(x_nchw, (0, 2, 3, 1))
    y0 = _ref_conv_bn_lrelu(x, *p0, stride=2)
    y1 = _ref_conv_bn_lrelu(y0, *p1, stride=1)
    y2 = _ref_conv_bn_lrelu(y1, *p2, stride=1)
    return jnp.transpose(y0 + y2, (1, 0, 2, 3))[:, :, :, :].transpose(0, 1, 2, 3) if False else \
        jnp.transpose(y0 + y2, (0, 3, 1, 2))


if __name__ == "__main__":
    key = jax.random.PRNGKey(0)
    kx, k0, k1, k2 = jax.random.split(key, 4)

    in_c, out_c = 4, 8
    x = jax.random.normal(kx, (2, in_c, 16, 16), jnp.float32)    # NCHW, as in PyTorch

    p0 = init_conv_bn_params(k0, in_c, out_c)     # stride-2 head conv
    p1 = init_conv_bn_params(k1, out_c, out_c)    # res block conv 1
    p2 = init_conv_bn_params(k2, out_c, out_c)    # res block conv 2

    out = jax.block_until_ready(jax.jit(conv_res_block_forward)(x, p0, p1, p2))

    assert out.shape == (2, out_c, 8, 8), out.shape
    assert out.dtype == jnp.float32

    ref = jax.block_until_ready(jax.jit(_reference_forward)(x, p0, p1, p2))
    max_err = float(jnp.max(jnp.abs(out - ref)))
    # Tolerance covers f32 accumulation-order differences plus rare bf16 re-rounding of the
    # intermediate activations (both kernel and reference stage the ResBlock inputs in bf16);
    # a real tap/shift/mask bug would produce O(1) errors.
    assert max_err < 1e-2, f"max abs error vs reference: {max_err}"

    print("KERNEL_OK")
</pallas_src>

<mosaic_0001>
module attributes {stable_mosaic.version = 11 : i64} {
  func.func @kernel(%arg0: i32, %arg1: memref<16x256xbf16, #tpu.memory_space<vmem>>, %arg2: memref<1x256xf32, #tpu.memory_space<vmem>>, %arg3: memref<8x36xbf16, #tpu.memory_space<vmem>>, %arg4: memref<8x72xbf16, #tpu.memory_space<vmem>>, %arg5: memref<8x72xbf16, #tpu.memory_space<vmem>>, %arg6: memref<3x8x1xf32, #tpu.memory_space<vmem>>, %arg7: memref<3x8x1xf32, #tpu.memory_space<vmem>>, %arg8: memref<8x256xf32, #tpu.memory_space<vmem>>) attributes {dimension_semantics = [#tpu.dimension_semantics<parallel>], iteration_bounds = array<i64: 1>, scalar_prefetch = 0 : i64, scratch_operands = 0 : i64, tpu.core_type = #tpu.core_type<tc>, window_params = [{transform_indices = @transform_0, window_bounds = array<i64: 16, 256>}, {transform_indices = @transform_1, window_bounds = array<i64: 1, 256>}, {pipeline_mode = #tpu.pipeline_mode<synchronous>, transform_indices = @transform_2, window_bounds = array<i64: 8, 36>}, {pipeline_mode = #tpu.pipeline_mode<synchronous>, transform_indices = @transform_3, window_bounds = array<i64: 8, 72>}, {pipeline_mode = #tpu.pipeline_mode<synchronous>, transform_indices = @transform_4, window_bounds = array<i64: 8, 72>}, {pipeline_mode = #tpu.pipeline_mode<synchronous>, transform_indices = @transform_5, window_bounds = array<i64: 3, 8, 1>}, {pipeline_mode = #tpu.pipeline_mode<synchronous>, transform_indices = @transform_6, window_bounds = array<i64: 3, 8, 1>}, {transform_indices = @transform_7, window_bounds = array<i64: 8, 256>}]} {
    %c0 = arith.constant 0 : index
    %c0_0 = arith.constant 0 : index
    %0 = vector.load %arg1[%c0, %c0_0] : memref<16x256xbf16, #tpu.memory_space<vmem>>, vector<16x256xbf16>
    %c0_1 = arith.constant 0 : index
    %c0_2 = arith.constant 0 : index
    %1 = vector.load %arg2[%c0_1, %c0_2] : memref<1x256xf32, #tpu.memory_space<vmem>>, vector<1x256xf32>
    %2 = vector.extract_strided_slice %0 {offsets = [12, 0], sizes = [4, 256], strides = [1, 1]} : vector<16x256xbf16> to vector<4x256xbf16>
    %cst = arith.constant 0.000000e+00 : bf16
    %3 = vector.broadcast %cst : bf16 to vector<4x11xbf16>
    %4 = vector.extract_strided_slice %2 {offsets = [0, 0], sizes = [4, 245], strides = [1, 1]} : vector<4x256xbf16> to vector<4x245xbf16>
    %5 = tpu.concatenate %3, %4 in 1 : vector<4x11xbf16>, vector<4x245xbf16> -> vector<4x256xbf16>
    %6 = vector.extract_strided_slice %0 {offsets = [8, 0], sizes = [4, 256], strides = [1, 1]} : vector<16x256xbf16> to vector<4x256xbf16>
    %cst_3 = arith.constant 0.000000e+00 : bf16
    %7 = vector.broadcast %cst_3 : bf16 to vector<4x10xbf16>
    %8 = vector.extract_strided_slice %6 {offsets = [0, 0], sizes = [4, 246], strides = [1, 1]} : vector<4x256xbf16> to vector<4x246xbf16>
    %9 = tpu.concatenate %7, %8 in 1 : vector<4x10xbf16>, vector<4x246xbf16> -> vector<4x256xbf16>
    %10 = vector.extract_strided_slice %0 {offsets = [12, 0], sizes = [4, 256], strides = [1, 1]} : vector<16x256xbf16> to vector<4x256xbf16>
    %cst_4 = arith.constant 0.000000e+00 : bf16
    %11 = vector.broadcast %cst_4 : bf16 to vector<4x10xbf16>
    %12 = vector.extract_strided_slice %10 {offsets = [0, 0], sizes = [4, 246], strides = [1, 1]} : vector<4x256xbf16> to vector<4x246xbf16>
    %13 = tpu.concatenate %11, %12 in 1 : vector<4x10xbf16>, vector<4x246xbf16> -> vector<4x256xbf16>
    %14 = vector.extract_strided_slice %0 {offsets = [4, 0], sizes = [4, 256], strides = [1, 1]} : vector<16x256xbf16> to vector<4x256xbf16>
    %cst_5 = arith.constant 0.000000e+00 : bf16
    %15 = vector.broadcast %cst_5 : bf16 to vector<4x1xbf16>
    %16 = vector.extract_strided_slice %14 {offsets = [0, 0], sizes = [4, 255], strides = [1, 1]} : vector<4x256xbf16> to vector<4x255xbf16>
    %17 = tpu.concatenate %15, %16 in 1 : vector<4x1xbf16>, vector<4x255xbf16> -> vector<4x256xbf16>
    %18 = vector.extract_strided_slice %0 {offsets = [0, 0], sizes = [4, 256], strides = [1, 1]} : vector<16x256xbf16> to vector<4x256xbf16>
    %19 = vector.extract_strided_slice %0 {offsets = [4, 0], sizes = [4, 256], strides = [1, 1]} : vector<16x256xbf16> to vector<4x256xbf16>
    %20 = vector.extract_strided_slice %0 {offsets = [12, 0], sizes = [4, 256], strides = [1, 1]} : vector<16x256xbf16> to vector<4x256xbf16>
    %cst_6 = arith.constant 0.000000e+00 : bf16
    %21 = vector.broadcast %cst_6 : bf16 to vector<4x1xbf16>
    %22 = vector.extract_strided_slice %20 {offsets = [0, 0], sizes = [4, 255], strides = [1, 1]} : vector<4x256xbf16> to vector<4x255xbf16>
    %23 = tpu.concatenate %21, %22 in 1 : vector<4x1xbf16>, vector<4x255xbf16> -> vector<4x256xbf16>
    %24 = vector.extract_strided_slice %0 {offsets = [8, 0], sizes = [4, 256], strides = [1, 1]} : vector<16x256xbf16> to vector<4x256xbf16>
    %25 = vector.extract_strided_slice %0 {offsets = [12, 0], sizes = [4, 256], strides = [1, 1]} : vector<16x256xbf16> to vector<4x256xbf16>
    %26 = tpu.concatenate %5, %9, %13, %17, %18, %19, %23, %24, %25 in 0 : vector<4x256xbf16>, vector<4x256xbf16>, vector<4x256xbf16>, vector<4x256xbf16>, vector<4x256xbf16>, vector<4x256xbf16>, vector<4x256xbf16>, vector<4x256xbf16>, vector<4x256xbf16> -> vector<36x256xbf16>
    %c0_7 = arith.constant 0 : index
    %c0_8 = arith.constant 0 : index
    %27 = vector.load %arg3[%c0_7, %c0_8] : memref<8x36xbf16, #tpu.memory_space<vmem>>, vector<8x36xbf16>
    %cst_9 = arith.constant dense<0.000000e+00> : vector<8x256xf32>
    %28 = tpu.matmul %27, %26, %cst_9 {dimension_numbers = #tpu.dot_dimension_numbers<[1], [0], [0], [1], [0, 0, 1, 1], [], []>} : vector<8x36xbf16>, vector<36x256xbf16>, vector<8x256xf32> -> vector<8x256xf32>
    %c0_10 = arith.constant 0 : index
    %c0_11 = arith.constant 0 : index
    %c0_12 = arith.constant 0 : index
    %29 = vector.load %arg6[%c0_10, %c0_11, %c0_12] : memref<3x8x1xf32, #tpu.memory_space<vmem>>, vector<1x8x1xf32>
    %30 = vector.shape_cast %29 : vector<1x8x1xf32> to vector<8x1xf32>
    %31 = vector.broadcast %30 : vector<8x1xf32> to vector<8x256xf32>
    %32 = arith.mulf %28, %31 : vector<8x256xf32>
    %c0_13 = arith.constant 0 : index
    %c0_14 = arith.constant 0 : index
    %c0_15 = arith.constant 0 : index
    %33 = vector.load %arg7[%c0_13, %c0_14, %c0_15] : memref<3x8x1xf32, #tpu.memory_space<vmem>>, vector<1x8x1xf32>
    %34 = vector.shape_cast %33 : vector<1x8x1xf32> to vector<8x1xf32>
    %35 = vector.broadcast %34 : vector<8x1xf32> to vector<8x256xf32>
    %36 = arith.addf %32, %35 : vector<8x256xf32>
    %cst_16 = arith.constant 0.000000e+00 : f32
    %37 = vector.broadcast %cst_16 : f32 to vector<8x256xf32>
    %38 = arith.cmpf oge, %36, %37 : vector<8x256xf32>
    %cst_17 = arith.constant 0.00999999977 : f32
    %39 = vector.broadcast %cst_17 : f32 to vector<8x256xf32>
    %40 = arith.mulf %39, %36 : vector<8x256xf32>
    %41 = arith.select %38, %36, %40 : vector<8x256xi1>, vector<8x256xf32>
    %42 = vector.broadcast %1 : vector<1x256xf32> to vector<8x256xf32>
    %43 = arith.mulf %41, %42 : vector<8x256xf32>
    %44 = arith.truncf %43 : vector<8x256xf32> to vector<8x256xbf16>
    %cst_18 = arith.constant 0.000000e+00 : bf16
    %45 = vector.broadcast %cst_18 : bf16 to vector<8x11xbf16>
    %46 = vector.extract_strided_slice %44 {offsets = [0, 0], sizes = [8, 245], strides = [1, 1]} : vector<8x256xbf16> to vector<8x245xbf16>
    %47 = tpu.concatenate %45, %46 in 1 : vector<8x11xbf16>, vector<8x245xbf16> -> vector<8x256xbf16>
    %cst_19 = arith.constant 0.000000e+00 : bf16
    %48 = vector.broadcast %cst_19 : bf16 to vector<8x10xbf16>
    %49 = vector.extract_strided_slice %44 {offsets = [0, 0], sizes = [8, 246], strides = [1, 1]} : vector<8x256xbf16> to vector<8x246xbf16>
    %50 = tpu.concatenate %48, %49 in 1 : vector<8x10xbf16>, vector<8x246xbf16> -> vector<8x256xbf16>
    %cst_20 = arith.constant 0.000000e+00 : bf16
    %51 = vector.broadcast %cst_20 : bf16 to vector<8x9xbf16>
    %52 = vector.extract_strided_slice %44 {offsets = [0, 0], sizes = [8, 247], strides = [1, 1]} : vector<8x256xbf16> to vector<8x247xbf16>
    %53 = tpu.concatenate %51, %52 in 1 : vector<8x9xbf16>, vector<8x247xbf16> -> vector<8x256xbf16>
    %cst_21 = arith.constant 0.000000e+00 : bf16
    %54 = vector.broadcast %cst_21 : bf16 to vector<8x1xbf16>
    %55 = vector.extract_strided_slice %44 {offsets = [0, 0], sizes = [8, 255], strides = [1, 1]} : vector<8x256xbf16> to vector<8x255xbf16>
    %56 = tpu.concatenate %54, %55 in 1 : vector<8x1xbf16>, vector<8x255xbf16> -> vector<8x256xbf16>
    %cst_22 = arith.constant 0.000000e+00 : bf16
    %57 = vector.broadcast %cst_22 : bf16 to vector<8x1xbf16>
    %58 = vector.extract_strided_slice %44 {offsets = [0, 1], sizes = [8, 255], strides = [1, 1]} : vector<8x256xbf16> to vector<8x255xbf16>
    %59 = tpu.concatenate %58, %57 in 1 : vector<8x255xbf16>, vector<8x1xbf16> -> vector<8x256xbf16>
    %cst_23 = arith.constant 0.000000e+00 : bf16
    %60 = vector.broadcast %cst_23 : bf16 to vector<8x9xbf16>
    %61 = vector.extract_strided_slice %44 {offsets = [0, 9], sizes = [8, 247], strides = [1, 1]} : vector<8x256xbf16> to vector<8x247xbf16>
    %62 = tpu.concatenate %61, %60 in 1 : vector<8x247xbf16>, vector<8x9xbf16> -> vector<8x256xbf16>
    %cst_24 = arith.constant 0.000000e+00 : bf16
    %63 = vector.broadcast %cst_24 : bf16 to vector<8x10xbf16>
    %64 = vector.extract_strided_slice %44 {offsets = [0, 10], sizes = [8, 246], strides = [1, 1]} : vector<8x256xbf16> to vector<8x246xbf16>
    %65 = tpu.concatenate %64, %63 in 1 : vector<8x246xbf16>, vector<8x10xbf16> -> vector<8x256xbf16>
    %cst_25 = arith.constant 0.000000e+00 : bf16
    %66 = vector.broadcast %cst_25 : bf16 to vector<8x11xbf16>
    %67 = vector.extract_strided_slice %44 {offsets = [0, 11], sizes = [8, 245], strides = [1, 1]} : vector<8x256xbf16> to vector<8x245xbf16>
    %68 = tpu.concatenate %67, %66 in 1 : vector<8x245xbf16>, vector<8x11xbf16> -> vector<8x256xbf16>
    %69 = tpu.concatenate %47, %50, %53, %56, %44, %59, %62, %65, %68 in 0 : vector<8x256xbf16>, vector<8x256xbf16>, vector<8x256xbf16>, vector<8x256xbf16>, vector<8x256xbf16>, vector<8x256xbf16>, vector<8x256xbf16>, vector<8x256xbf16>, vector<8x256xbf16> -> vector<72x256xbf16>
    %c0_26 = arith.constant 0 : index
    %c0_27 = arith.constant 0 : index
    %70 = vector.load %arg4[%c0_26, %c0_27] : memref<8x72xbf16, #tpu.memory_space<vmem>>, vector<8x72xbf16>
    %cst_28 = arith.constant dense<0.000000e+00> : vector<8x256xf32>
    %71 = tpu.matmul %70, %69, %cst_28 {dimension_numbers = #tpu.dot_dimension_numbers<[1], [0], [0], [1], [0, 0, 1, 1], [], []>} : vector<8x72xbf16>, vector<72x256xbf16>, vector<8x256xf32> -> vector<8x256xf32>
    %c1 = arith.constant 1 : index
    %c0_29 = arith.constant 0 : index
    %c0_30 = arith.constant 0 : index
    %72 = vector.load %arg6[%c1, %c0_29, %c0_30] : memref<3x8x1xf32, #tpu.memory_space<vmem>>, vector<1x8x1xf32>
    %73 = vector.shape_cast %72 : vector<1x8x1xf32> to vector<8x1xf32>
    %74 = vector.broadcast %73 : vector<8x1xf32> to vector<8x256xf32>
    %75 = arith.mulf %71, %74 : vector<8x256xf32>
    %c1_31 = arith.constant 1 : index
    %c0_32 = arith.constant 0 : index
    %c0_33 = arith.constant 0 : index
    %76 = vector.load %arg7[%c1_31, %c0_32, %c0_33] : memref<3x8x1xf32, #tpu.memory_space<vmem>>, vector<1x8x1xf32>
    %77 = vector.shape_cast %76 : vector<1x8x1xf32> to vector<8x1xf32>
    %78 = vector.broadcast %77 : vector<8x1xf32> to vector<8x256xf32>
    %79 = arith.addf %75, %78 : vector<8x256xf32>
    %cst_34 = arith.constant 0.000000e+00 : f32
    %80 = vector.broadcast %cst_34 : f32 to vector<8x256xf32>
    %81 = arith.cmpf oge, %79, %80 : vector<8x256xf32>
    %cst_35 = arith.constant 0.00999999977 : f32
    %82 = vector.broadcast %cst_35 : f32 to vector<8x256xf32>
    %83 = arith.mulf %82, %79 : vector<8x256xf32>
    %84 = arith.select %81, %79, %83 : vector<8x256xi1>, vector<8x256xf32>
    %85 = vector.broadcast %1 : vector<1x256xf32> to vector<8x256xf32>
    %86 = arith.mulf %84, %85 : vector<8x256xf32>
    %87 = arith.truncf %86 : vector<8x256xf32> to vector<8x256xbf16>
    %cst_36 = arith.constant 0.000000e+00 : bf16
    %88 = vector.broadcast %cst_36 : bf16 to vector<8x11xbf16>
    %89 = vector.extract_strided_slice %87 {offsets = [0, 0], sizes = [8, 245], strides = [1, 1]} : vector<8x256xbf16> to vector<8x245xbf16>
    %90 = tpu.concatenate %88, %89 in 1 : vector<8x11xbf16>, vector<8x245xbf16> -> vector<8x256xbf16>
    %cst_37 = arith.constant 0.000000e+00 : bf16
    %91 = vector.broadcast %cst_37 : bf16 to vector<8x10xbf16>
    %92 = vector.extract_strided_slice %87 {offsets = [0, 0], sizes = [8, 246], strides = [1, 1]} : vector<8x256xbf16> to vector<8x246xbf16>
    %93 = tpu.concatenate %91, %92 in 1 : vector<8x10xbf16>, vector<8x246xbf16> -> vector<8x256xbf16>
    %cst_38 = arith.constant 0.000000e+00 : bf16
    %94 = vector.broadcast %cst_38 : bf16 to vector<8x9xbf16>
    %95 = vector.extract_strided_slice %87 {offsets = [0, 0], sizes = [8, 247], strides = [1, 1]} : vector<8x256xbf16> to vector<8x247xbf16>
    %96 = tpu.concatenate %94, %95 in 1 : vector<8x9xbf16>, vector<8x247xbf16> -> vector<8x256xbf16>
    %cst_39 = arith.constant 0.000000e+00 : bf16
    %97 = vector.broadcast %cst_39 : bf16 to vector<8x1xbf16>
    %98 = vector.extract_strided_slice %87 {offsets = [0, 0], sizes = [8, 255], strides = [1, 1]} : vector<8x256xbf16> to vector<8x255xbf16>
    %99 = tpu.concatenate %97, %98 in 1 : vector<8x1xbf16>, vector<8x255xbf16> -> vector<8x256xbf16>
    %cst_40 = arith.constant 0.000000e+00 : bf16
    %100 = vector.broadcast %cst_40 : bf16 to vector<8x1xbf16>
    %101 = vector.extract_strided_slice %87 {offsets = [0, 1], sizes = [8, 255], strides = [1, 1]} : vector<8x256xbf16> to vector<8x255xbf16>
    %102 = tpu.concatenate %101, %100 in 1 : vector<8x255xbf16>, vector<8x1xbf16> -> vector<8x256xbf16>
    %cst_41 = arith.constant 0.000000e+00 : bf16
    %103 = vector.broadcast %cst_41 : bf16 to vector<8x9xbf16>
    %104 = vector.extract_strided_slice %87 {offsets = [0, 9], sizes = [8, 247], strides = [1, 1]} : vector<8x256xbf16> to vector<8x247xbf16>
    %105 = tpu.concatenate %104, %103 in 1 : vector<8x247xbf16>, vector<8x9xbf16> -> vector<8x256xbf16>
    %cst_42 = arith.constant 0.000000e+00 : bf16
    %106 = vector.broadcast %cst_42 : bf16 to vector<8x10xbf16>
    %107 = vector.extract_strided_slice %87 {offsets = [0, 10], sizes = [8, 246], strides = [1, 1]} : vector<8x256xbf16> to vector<8x246xbf16>
    %108 = tpu.concatenate %107, %106 in 1 : vector<8x246xbf16>, vector<8x10xbf16> -> vector<8x256xbf16>
    %cst_43 = arith.constant 0.000000e+00 : bf16
    %109 = vector.broadcast %cst_43 : bf16 to vector<8x11xbf16>
    %110 = vector.extract_strided_slice %87 {offsets = [0, 11], sizes = [8, 245], strides = [1, 1]} : vector<8x256xbf16> to vector<8x245xbf16>
    %111 = tpu.concatenate %110, %109 in 1 : vector<8x245xbf16>, vector<8x11xbf16> -> vector<8x256xbf16>
    %112 = tpu.concatenate %90, %93, %96, %99, %87, %102, %105, %108, %111 in 0 : vector<8x256xbf16>, vector<8x256xbf16>, vector<8x256xbf16>, vector<8x256xbf16>, vector<8x256xbf16>, vector<8x256xbf16>, vector<8x256xbf16>, vector<8x256xbf16>, vector<8x256xbf16> -> vector<72x256xbf16>
    %c0_44 = arith.constant 0 : index
    %c0_45 = arith.constant 0 : index
    %113 = vector.load %arg5[%c0_44, %c0_45] : memref<8x72xbf16, #tpu.memory_space<vmem>>, vector<8x72xbf16>
    %cst_46 = arith.constant dense<0.000000e+00> : vector<8x256xf32>
    %114 = tpu.matmul %113, %112, %cst_46 {dimension_numbers = #tpu.dot_dimension_numbers<[1], [0], [0], [1], [0, 0, 1, 1], [], []>} : vector<8x72xbf16>, vector<72x256xbf16>, vector<8x256xf32> -> vector<8x256xf32>
    %c2 = arith.constant 2 : index
    %c0_47 = arith.constant 0 : index
    %c0_48 = arith.constant 0 : index
    %115 = vector.load %arg6[%c2, %c0_47, %c0_48] : memref<3x8x1xf32, #tpu.memory_space<vmem>>, vector<1x8x1xf32>
    %116 = vector.shape_cast %115 : vector<1x8x1xf32> to vector<8x1xf32>
    %117 = vector.broadcast %116 : vector<8x1xf32> to vector<8x256xf32>
    %118 = arith.mulf %114, %117 : vector<8x256xf32>
    %c2_49 = arith.constant 2 : index
    %c0_50 = arith.constant 0 : index
    %c0_51 = arith.constant 0 : index
    %119 = vector.load %arg7[%c2_49, %c0_50, %c0_51] : memref<3x8x1xf32, #tpu.memory_space<vmem>>, vector<1x8x1xf32>
    %120 = vector.shape_cast %119 : vector<1x8x1xf32> to vector<8x1xf32>
    %121 = vector.broadcast %120 : vector<8x1xf32> to vector<8x256xf32>
    %122 = arith.addf %118, %121 : vector<8x256xf32>
    %cst_52 = arith.constant 0.000000e+00 : f32
    %123 = vector.broadcast %cst_52 : f32 to vector<8x256xf32>
    %124 = arith.cmpf oge, %122, %123 : vector<8x256xf32>
    %cst_53 = arith.constant 0.00999999977 : f32
    %125 = vector.broadcast %cst_53 : f32 to vector<8x256xf32>
    %126 = arith.mulf %125, %122 : vector<8x256xf32>
    %127 = arith.select %124, %122, %126 : vector<8x256xi1>, vector<8x256xf32>
    %128 = arith.addf %43, %127 : vector<8x256xf32>
    %c0_54 = arith.constant 0 : index
    %c0_55 = arith.constant 0 : index
    %129 = vector.load %arg8[%c0_54, %c0_55] : memref<8x256xf32, #tpu.memory_space<vmem>>, vector<8x256xf32>
    tpu.vector_store %arg8[%c0_54, %c0_55], %128 {strides = array<i32>} : memref<8x256xf32, #tpu.memory_space<vmem>>, vector<8x256xf32>,
    return
  }
  func.func @transform_0(%arg0: i32) -> (i32, i32) {
    %c0_i32 = arith.constant 0 : i32
    %c0_i32_0 = arith.constant 0 : i32
    return %c0_i32, %arg0 : i32, i32
  }
  func.func @transform_1(%arg0: i32) -> (i32, i32) {
    %c0_i32 = arith.constant 0 : i32
    %c0_i32_0 = arith.constant 0 : i32
    return %c0_i32, %arg0 : i32, i32
  }
  func.func @transform_2(%arg0: i32) -> (i32, i32) {
    %c0_i32 = arith.constant 0 : i32
    %c0_i32_0 = arith.constant 0 : i32
    %c0_i32_1 = arith.constant 0 : i32
    return %c0_i32, %c0_i32_0 : i32, i32
  }
  func.func @transform_3(%arg0: i32) -> (i32, i32) {
    %c0_i32 = arith.constant 0 : i32
    %c0_i32_0 = arith.constant 0 : i32
    %c0_i32_1 = arith.constant 0 : i32
    return %c0_i32, %c0_i32_0 : i32, i32
  }
  func.func @transform_4(%arg0: i32) -> (i32, i32) {
    %c0_i32 = arith.constant 0 : i32
    %c0_i32_0 = arith.constant 0 : i32
    %c0_i32_1 = arith.constant 0 : i32
    return %c0_i32, %c0_i32_0 : i32, i32
  }
  func.func @transform_5(%arg0: i32) -> (i32, i32, i32) {
    %c0_i32 = arith.constant 0 : i32
    %c0_i32_0 = arith.constant 0 : i32
    %c0_i32_1 = arith.constant 0 : i32
    %c0_i32_2 = arith.constant 0 : i32
    return %c0_i32, %c0_i32_0, %c0_i32_1 : i32, i32, i32
  }
  func.func @transform_6(%arg0: i32) -> (i32, i32, i32) {
    %c0_i32 = arith.constant 0 : i32
    %c0_i32_0 = arith.constant 0 : i32
    %c0_i32_1 = arith.constant 0 : i32
    %c0_i32_2 = arith.constant 0 : i32
    return %c0_i32, %c0_i32_0, %c0_i32_1 : i32, i32, i32
  }
  func.func @transform_7(%arg0: i32) -> (i32, i32) {
    %c0_i32 = arith.constant 0 : i32
    %c0_i32_0 = arith.constant 0 : i32
    return %c0_i32, %arg0 : i32, i32
  }
}

</mosaic_0001>

<llo_original>
// kernel: conv_res_block_forward.1
$region0: #{conv_res_block_forward.1}
  #allocation0 [shape = 'u32[]', space=smem, size = 0x4, offset = 0x4, fixed_abs, tag = 'smem constant byte address 0x4 - core index']
  #allocation1 [shape = 'u32[144,128]{1,0:T(1,128)}', space=vmem, size = 0x12000, scoped, tag = 'internal scratch']
  %s0 = inlined_call_operand.vmem [shape: bf16[16,256], index: 0, kind: input, shape index: {}]
  %s1 = inlined_call_operand.vmem [shape: f32[1,256], index: 1, kind: input, shape index: {}]
  %s2 = inlined_call_operand.vmem [shape: bf16[8,36], index: 2, kind: input, shape index: {}]
  %s3 = inlined_call_operand.vmem [shape: bf16[8,72], index: 3, kind: input, shape index: {}]
  %s4 = inlined_call_operand.vmem [shape: bf16[8,72], index: 4, kind: input, shape index: {}]
  %s5 = inlined_call_operand.vmem [shape: f32[3,8,1], index: 5, kind: input, shape index: {}]
  %s6 = inlined_call_operand.vmem [shape: f32[3,8,1], index: 6, kind: input, shape index: {}]
  %s7 = inlined_call_operand.vmem [shape: f32[8,256], index: 7, kind: output, shape index: {}]
  %s8 = sld [smem:[#allocation0]]
  $region38: #{conv_res_block_forward.1} parent=0
    _
  %s10 = ssub.s32 1, %s8
  %s11 = scalar_select 0, %s10, %s8
  // Predicated region
  $region2: #{conv_res_block_forward.1} parent=0 // pred_check
    _
  $region3: #{conv_res_block_forward.1} parent=0 // pred_check_branch
    %13 = sbr.rel (0) target = $region5
  $region4: #{conv_res_block_forward.1} parent=0 // pred_region
    _
  $region5: #{conv_res_block_forward.1} parent=0 // pred_fallthru
    _
  // Predicated region
  $region6: #{conv_res_block_forward.1} parent=0 // pred_check
    _
  $region7: #{conv_res_block_forward.1} parent=0 // pred_check_branch
    %15 = sbr.rel (0) target = $region9
  $region8: #{conv_res_block_forward.1} parent=0 // pred_region
    _
  $region9: #{conv_res_block_forward.1} parent=0 // pred_fallthru
    _
  // Predicated region
  $region10: #{conv_res_block_forward.1} parent=0 // pred_check
    _
  $region11: #{conv_res_block_forward.1} parent=0 // pred_check_branch
    %17 = sbr.rel (0) target = $region13
  $region12: #{conv_res_block_forward.1} parent=0 // pred_region
    _
  $region13: #{conv_res_block_forward.1} parent=0 // pred_fallthru
    _
  // Predicated region
  $region14: #{conv_res_block_forward.1} parent=0 // pred_check
    _
  $region15: #{conv_res_block_forward.1} parent=0 // pred_check_branch
    %19 = sbr.rel (0) target = $region17
  $region16: #{conv_res_block_forward.1} parent=0 // pred_region
    _
  $region17: #{conv_res_block_forward.1} parent=0 // pred_fallthru
    _
  // Predicated region
  $region18: #{conv_res_block_forward.1} parent=0 // pred_check
    _
  $region19: #{conv_res_block_forward.1} parent=0 // pred_check_branch
    %21 = sbr.rel (0) target = $region21
  $region20: #{conv_res_block_forward.1} parent=0 // pred_region
    _
  $region21: #{conv_res_block_forward.1} parent=0 // pred_fallthru
    _
  // Predicated region
  $region22: #{conv_res_block_forward.1} parent=0 // pred_check
    _
  $region23: #{conv_res_block_forward.1} parent=0 // pred_check_branch
    %23 = sbr.rel (0) target = $region25
  $region24: #{conv_res_block_forward.1} parent=0 // pred_region
    _
  $region25: #{conv_res_block_forward.1} parent=0 // pred_fallthru
    _
  // Predicated region
  $region26: #{conv_res_block_forward.1} parent=0 // pred_check
    _
  $region27: #{conv_res_block_forward.1} parent=0 // pred_check_branch
    %25 = sbr.rel (0) target = $region29
  $region28: #{conv_res_block_forward.1} parent=0 // pred_region
    _
  $region29: #{conv_res_block_forward.1} parent=0 // pred_fallthru
    _
  %v27 = vld [vmem:[%s0] sm:$0xff]
  %v28 = vld [vmem:[%s0 + $0x8] sm:$0xff]
  %v29 = vld [vmem:[%s1] sm:$0x3]
  %v31 = vunpack.c.l.b16 %v28
  %v32 = vunpack.c.h.b16 %v28
  %v33 = vpack.c.b16 %v31, %v31
  %v34 = vpack.c.b16 %v32, %v32
  %v35 = vrot.slane %v33, 2
  %v36 = vrot.slane %v34, 2
  %37 = vrot.lane.b32.xlu0 %v35, 11
  %v38 = vpop.permute.xlu0 %37
  %39 = vrot.lane.b32.xlu0 %v36, 11
  %v40 = vpop.permute.xlu0 %39
  %vm41 = vcmask 89088
  %v42 = vsel %vm41, %v38, %v40
  %vm43 = vcmask 89088
  %v46 = vsel %vm43, 0, %v38
  %47 = vrot.lane.b32.xlu0 %v33, 10
  %v48 = vpop.permute.xlu0 %47
  %49 = vrot.lane.b32.xlu0 %v34, 10
  %v50 = vpop.permute.xlu0 %49
  %vm51 = vcmask 80896
  %v52 = vsel %vm51, %v48, %v50
  %vm53 = vcmask 80896
  %v55 = vsel %vm53, 0, %v48
  %56 = vrot.lane.b32.xlu0 %v35, 10
  %v57 = vpop.permute.xlu0 %56
  %58 = vrot.lane.b32.xlu0 %v36, 10
  %v59 = vpop.permute.xlu0 %58
  %v60 = vsel %vm51, %v57, %v59
  %v62 = vsel %vm53, 0, %v57
  %v64 = vunpack.c.l.b16 %v27
  %v65 = vunpack.c.h.b16 %v27
  %v66 = vpack.c.b16 %v64, %v64
  %v67 = vpack.c.b16 %v65, %v65
  %v68 = vrot.slane %v66, 2
  %v69 = vrot.slane %v67, 2
  %70 = vrot.lane.b32.xlu0 %v68, 1
  %v71 = vpop.permute.xlu0 %70
  %72 = vrot.lane.b32.xlu0 %v69, 1
  %v73 = vpop.permute.xlu0 %72
  %vm74 = vcmask 7168
  %v75 = vsel %vm74, %v71, %v73
  %vm76 = vcmask 7168
  %v78 = vsel %vm76, 0, %v71
  %79 = vrot.lane.b32.xlu0 %v35, 1
  %v80 = vpop.permute.xlu0 %79
  %81 = vrot.lane.b32.xlu0 %v36, 1
  %v82 = vpop.permute.xlu0 %81
  %v83 = vsel %vm74, %v80, %v82
  %v85 = vsel %vm76, 0, %v80
  %v87 = vrot.slane %v55, 6
  %v88 = vrot.slane %v52, 6
  %v90 = vrot.slane %v62, 4
  %v91 = vrot.slane %v60, 4
  %v93 = vrot.slane %v78, 2
  %v94 = vrot.slane %v75, 2
  %v96 = vrot.slane %v85, 4
  %v97 = vrot.slane %v83, 4
  %vm98 = vcmask 1041408
  %v100 = vsel %vm98, %v46, %v87
  %v103 = vsel %vm98, %v42, %v88
  %vm104 = vcmask 1043456
  %v106 = vsel %vm104, %v100, %v90
  %v108 = vsel %vm104, %v103, %v91
  %vm109 = vcmask 1045504
  %v111 = vsel %vm109, %v106, %v93
  %v114 = vsel %vm109, %v108, %v94
  %v119 = vsel %vm104, %v66, %v96
  %v121 = vsel %vm104, %v67, %v97
  %v123 = vsel %vm109, %v119, %v35
  %v126 = vsel %vm109, %v121, %v36
  %v128 = vld [vmem:[%s2] sm:$0xf]
  %vm129 = vcmask 293888
  %v131 = vsel %vm129, %v128, 0
  %v133 = vsel %vm98, %v35, 0
  %v135 = vsel %vm98, %v36, 0
  %137 = vmatprep.subr.bf16.mxu0 %v114
  %138 = vmatpush1.bf16.msra.mxu0 %v111
  %139 = vmatprep.subr.bf16.mxu0 %v126
  %140 = vmatpush1.bf16.msra.mxu0 %v123
  %141 = vmatprep.subr.bf16.mxu0 %v135
  %142 = vmatpush1.bf16.msra.mxu0 %v133
  %143 = vmatprep.subr.bf16.mxu0 0
  %144 = vmatpush1.bf16.msra.mxu0 0
  %145 = vmatprep.subr.bf16.mxu0 0
  %146 = vmatpush1.bf16.msra.mxu0 0
  %147 = vmatprep.subr.bf16.mxu0 0
  %148 = vmatpush1.bf16.msra.mxu0 0
  %149 = vmatprep.subr.bf16.mxu0 0
  %150 = vmatpush1.bf16.msra.mxu0 0
  %151 = vmatprep.subr.bf16.mxu0 0
  %152 = vmatpush1.bf16.msra.mxu0 0
  %153 = vmatprep.subr.bf16.mxu0 0
  %154 = vmatpush1.bf16.msra.mxu0 0
  %155 = vmatprep.subr.bf16.mxu0 0
  %156 = vmatpush1.bf16.msra.mxu0 0
  %157 = vmatprep.subr.bf16.mxu0 0
  %158 = vmatpush1.bf16.msra.mxu0 0
  %159 = vmatprep.subr.bf16.mxu0 0
  %160 = vmatpush1.bf16.msra.mxu0 0
  %161 = vmatprep.subr.bf16.mxu0 0
  %162 = vmatpush1.bf16.msra.mxu0 0
  %163 = vmatprep.subr.bf16.mxu0 0
  %164 = vmatpush1.bf16.msra.mxu0 0
  %165 = vmatprep.subr.bf16.mxu0 0
  %166 = vmatpush1.bf16.msra.mxu0 0
  %167 = vmatprep.subr.bf16.mxu0 0
  %168 = vmatpush1.bf16.msra.mxu0 0
  %169 = vmatprep.mubr.bf16.mxu0 0
  %170 = vmatmul.mubr.bf16.gmra.mrb[0].mxu0 %v131
  %v171 = vpop.f32.mrb[0].mxu0
  %v172 = vadd.f32 0.0, %v171
  %v173 = vpop.f32.mrb[0].mxu0
  %v174 = vadd.f32 0.0, %v173
  %v175 = vpop.f32.mrb[0].mxu0
  %v176 = vpop.f32.mrb[0].mxu0
  %177 = vdwg.mxu0
  %v178 = vld [vmem:[%s5] sm:$0xff]
  %180 = vset.pattern.permute.xlu0 0
  %181 = vperm.xlu0 %180, %v178
  %v182 = vpop.permute.xlu0 %181
  %v184 = vmul.f32 %v172, %v182
  %v185 = vmul.f32 %v174, %v182
  %v186 = vld [vmem:[%s6] sm:$0xff]
  %188 = vset.pattern.permute.xlu0 0
  %189 = vperm.xlu0 %188, %v186
  %v190 = vpop.permute.xlu0 %189
  %v192 = vadd.f32 %v184, %v190
  %v193 = vadd.f32 %v185, %v190
  %vm194 = vcmp.ge.f32.partialorder %v192, 0.0
  %vm195 = vcmp.ge.f32.partialorder %v193, 0.0
  %v196 = vmul.f32 %v192, 0.01
  %v197 = vmul.f32 %v193, 0.01
  %v198 = vsel %vm194, %v192, %v196
  %v199 = vsel %vm195, %v193, %v197
  %v201 = vlaneseq
  %v202 = vshrl.u32 %v201, 7
  %v203 = vsub.s32 0, %v202
  %v204 = vrot.slane %v29, %v203
  %v205 = vlaneseq
  %v206 = vshrl.u32 %v205, 7
  %v207 = vsub.s32 1, %v206
  %v208 = vrot.slane %v29, %v207
  %v211 = vmul.f32 %v198, %v204
  %v212 = vmul.f32 %v199, %v208
  %v213 = vpack.c.bf16 %v211, %v211
  %v214 = vpack.c.bf16 %v212, %v212
  %217 = vrot.lane.b32.xlu0 %v213, 11
  %v218 = vpop.permute.xlu0 %217
  %219 = vrot.lane.b32.xlu0 %v214, 11
  %v220 = vpop.permute.xlu0 %219
  %v221 = vsel %vm41, %v218, %v220
  %v223 = vsel %vm43, 0, %v218
  %224 = vrot.lane.b32.xlu0 %v213, 10
  %v225 = vpop.permute.xlu0 %224
  %226 = vrot.lane.b32.xlu0 %v214, 10
  %v227 = vpop.permute.xlu0 %226
  %v228 = vsel %vm51, %v225, %v227
  %v230 = vsel %vm53, 0, %v225
  %231 = vrot.lane.b32.xlu0 %v213, 9
  %v232 = vpop.permute.xlu0 %231
  %233 = vrot.lane.b32.xlu0 %v214, 9
  %v234 = vpop.permute.xlu0 %233
  %vm235 = vcmask 72704
  %v236 = vsel %vm235, %v232, %v234
  %vm237 = vcmask 72704
  %v239 = vsel %vm237, 0, %v232
  %240 = vrot.lane.b32.xlu0 %v213, 1
  %v241 = vpop.permute.xlu0 %240
  %242 = vrot.lane.b32.xlu0 %v214, 1
  %v243 = vpop.permute.xlu0 %242
  %v244 = vsel %vm74, %v241, %v243
  %v246 = vsel %vm76, 0, %v241
  %247 = vrot.lane.b32.xlu0 %v213, 127
  %v248 = vpop.permute.xlu0 %247
  %249 = vrot.lane.b32.xlu0 %v214, 127
  %v250 = vpop.permute.xlu0 %249
  %vm251 = vcmask 1039360
  %v252 = vsel %vm251, %v248, %v250
  %vm253 = vcmask 1039360
  %v255 = vsel %vm253, %v250, 0
  %256 = vrot.lane.b32.xlu0 %v213, 119
  %v257 = vpop.permute.xlu0 %256
  %258 = vrot.lane.b32.xlu0 %v214, 119
  %v259 = vpop.permute.xlu0 %258
  %vm260 = vcmask 973824
  %v261 = vsel %vm260, %v257, %v259
  %vm262 = vcmask 973824
  %v264 = vsel %vm262, %v259, 0
  %265 = vrot.lane.b32.xlu0 %v213, 118
  %v266 = vpop.permute.xlu0 %265
  %267 = vrot.lane.b32.xlu0 %v214, 118
  %v268 = vpop.permute.xlu0 %267
  %vm269 = vcmask 965632
  %v270 = vsel %vm269, %v266, %v268
  %vm271 = vcmask 965632
  %v273 = vsel %vm271, %v268, 0
  %274 = vrot.lane.b32.xlu0 %v213, 117
  %v275 = vpop.permute.xlu0 %274
  %276 = vrot.lane.b32.xlu0 %v214, 117
  %v277 = vpop.permute.xlu0 %276
  %vm278 = vcmask 957440
  %v279 = vsel %vm278, %v275, %v277
  %vm280 = vcmask 957440
  %v282 = vsel %vm280, %v277, 0
  %v284 = vrot.slane %v230, 4
  %v285 = vrot.slane %v228, 4
  %v287 = vrot.slane %v246, 4
  %v288 = vrot.slane %v244, 4
  %v290 = vrot.slane %v252, 4
  %v291 = vrot.slane %v255, 4
  %v293 = vrot.slane %v270, 4
  %v294 = vrot.slane %v273, 4
  %v296 = vsel %vm104, %v223, %v284
  %v300 = vsel %vm104, %v221, %v285
  %v303 = vsel %vm104, %v239, %v287
  %v307 = vsel %vm104, %v236, %v288
  %v311 = vsel %vm104, %v213, %v290
  %v315 = vsel %vm104, %v214, %v291
  %v319 = vsel %vm104, %v261, %v293
  %v322 = vsel %vm104, %v264, %v294
  %v324 = vld [vmem:[%s3] sm:$0xf]
  %vm325 = vcmask 588800
  %v327 = vsel %vm325, %v324, 0
  %v330 = vsel %vm104, %v279, 0
  %v332 = vsel %vm104, %v282, 0
  %334 = vmatprep.subr.bf16.mxu0 %v300
  %335 = vmatpush1.bf16.msra.mxu0 %v296
  %336 = vmatprep.subr.bf16.mxu0 %v307
  %337 = vmatpush1.bf16.msra.mxu0 %v303
  %338 = vmatprep.subr.bf16.mxu0 %v315
  %339 = vmatpush1.bf16.msra.mxu0 %v311
  %340 = vmatprep.subr.bf16.mxu0 %v322
  %341 = vmatpush1.bf16.msra.mxu0 %v319
  %342 = vmatprep.subr.bf16.mxu0 %v332
  %343 = vmatpush1.bf16.msra.mxu0 %v330
  %344 = vmatprep.subr.bf16.mxu0 0
  %345 = vmatpush1.bf16.msra.mxu0 0
  %346 = vmatprep.subr.bf16.mxu0 0
  %347 = vmatpush1.bf16.msra.mxu0 0
  %348 = vmatprep.subr.bf16.mxu0 0
  %349 = vmatpush1.bf16.msra.mxu0 0
  %350 = vmatprep.subr.bf16.mxu0 0
  %351 = vmatpush1.bf16.msra.mxu0 0
  %352 = vmatprep.subr.bf16.mxu0 0
  %353 = vmatpush1.bf16.msra.mxu0 0
  %354 = vmatprep.subr.bf16.mxu0 0
  %355 = vmatpush1.bf16.msra.mxu0 0
  %356 = vmatprep.subr.bf16.mxu0 0
  %357 = vmatpush1.bf16.msra.mxu0 0
  %358 = vmatprep.subr.bf16.mxu0 0
  %359 = vmatpush1.bf16.msra.mxu0 0
  %360 = vmatprep.subr.bf16.mxu0 0
  %361 = vmatpush1.bf16.msra.mxu0 0
  %362 = vmatprep.subr.bf16.mxu0 0
  %363 = vmatpush1.bf16.msra.mxu0 0
  %364 = vmatprep.subr.bf16.mxu0 0
  %365 = vmatpush1.bf16.msra.mxu0 0
  %366 = vmatprep.mubr.bf16.mxu0 0
  %367 = vmatmul.mubr.bf16.gmra.mrb[0].mxu0 %v327
  %v368 = vpop.f32.mrb[0].mxu0
  %v369 = vadd.f32 0.0, %v368
  %v370 = vpop.f32.mrb[0].mxu0
  %v371 = vadd.f32 0.0, %v370
  %v372 = vpop.f32.mrb[0].mxu0
  %v373 = vpop.f32.mrb[0].mxu0
  %374 = vdwg.mxu0
  %s375 = scalar_lea.vmem %s5, 8
  %v376 = vld [vmem:[%s375] sm:$0xff]
  %378 = vset.pattern.permute.xlu0 0
  %379 = vperm.xlu0 %378, %v376
  %v380 = vpop.permute.xlu0 %379
  %v382 = vmul.f32 %v369, %v380
  %v383 = vmul.f32 %v371, %v380
  %s384 = scalar_lea.vmem %s6, 8
  %v385 = vld [vmem:[%s384] sm:$0xff]
  %387 = vset.pattern.permute.xlu0 0
  %388 = vperm.xlu0 %387, %v385
  %v389 = vpop.permute.xlu0 %388
  %v391 = vadd.f32 %v382, %v389
  %v392 = vadd.f32 %v383, %v389
  %vm393 = vcmp.ge.f32.partialorder %v391, 0.0
  %vm394 = vcmp.ge.f32.partialorder %v392, 0.0
  %v395 = vmul.f32 %v391, 0.01
  %v396 = vmul.f32 %v392, 0.01
  %v397 = vsel %vm393, %v391, %v395
  %v398 = vsel %vm394, %v392, %v396
  %v399 = vmul.f32 %v397, %v204
  %v400 = vmul.f32 %v398, %v208
  %v401 = vpack.c.bf16 %v399, %v399
  %v402 = vpack.c.bf16 %v400, %v400
  %405 = vrot.lane.b32.xlu0 %v401, 11
  %v406 = vpop.permute.xlu0 %405
  %407 = vrot.lane.b32.xlu0 %v402, 11
  %v408 = vpop.permute.xlu0 %407
  %v409 = vsel %vm41, %v406, %v408
  %v411 = vsel %vm43, 0, %v406
  %412 = vrot.lane.b32.xlu0 %v401, 10
  %v413 = vpop.permute.xlu0 %412
  %414 = vrot.lane.b32.xlu0 %v402, 10
  %v415 = vpop.permute.xlu0 %414
  %v416 = vsel %vm51, %v413, %v415
  %v418 = vsel %vm53, 0, %v413
  %419 = vrot.lane.b32.xlu0 %v401, 9
  %v420 = vpop.permute.xlu0 %419
  %421 = vrot.lane.b32.xlu0 %v402, 9
  %v422 = vpop.permute.xlu0 %421
  %v423 = vsel %vm235, %v420, %v422
  %v425 = vsel %vm237, 0, %v420
  %426 = vrot.lane.b32.xlu0 %v401, 1
  %v427 = vpop.permute.xlu0 %426
  %428 = vrot.lane.b32.xlu0 %v402, 1
  %v429 = vpop.permute.xlu0 %428
  %v430 = vsel %vm74, %v427, %v429
  %v432 = vsel %vm76, 0, %v427
  %433 = vrot.lane.b32.xlu0 %v401, 127
  %v434 = vpop.permute.xlu0 %433
  %435 = vrot.lane.b32.xlu0 %v402, 127
  %v436 = vpop.permute.xlu0 %435
  %v437 = vsel %vm251, %v434, %v436
  %v439 = vsel %vm253, %v436, 0
  %440 = vrot.lane.b32.xlu0 %v401, 119
  %v441 = vpop.permute.xlu0 %440
  %442 = vrot.lane.b32.xlu0 %v402, 119
  %v443 = vpop.permute.xlu0 %442
  %v444 = vsel %vm260, %v441, %v443
  %v446 = vsel %vm262, %v443, 0
  %447 = vrot.lane.b32.xlu0 %v401, 118
  %v448 = vpop.permute.xlu0 %447
  %449 = vrot.lane.b32.xlu0 %v402, 118
  %v450 = vpop.permute.xlu0 %449
  %v451 = vsel %vm269, %v448, %v450
  %v453 = vsel %vm271, %v450, 0
  %454 = vrot.lane.b32.xlu0 %v401, 117
  %v455 = vpop.permute.xlu0 %454
  %456 = vrot.lane.b32.xlu0 %v402, 117
  %v457 = vpop.permute.xlu0 %456
  %v458 = vsel %vm278, %v455, %v457
  %v460 = vsel %vm280, %v457, 0
  %v462 = vrot.slane %v418, 4
  %v463 = vrot.slane %v416, 4
  %v465 = vrot.slane %v432, 4
  %v466 = vrot.slane %v430, 4
  %v468 = vrot.slane %v437, 4
  %v469 = vrot.slane %v439, 4
  %v471 = vrot.slane %v451, 4
  %v472 = vrot.slane %v453, 4
  %v474 = vsel %vm104, %v411, %v462
  %v478 = vsel %vm104, %v409, %v463
  %v481 = vsel %vm104, %v425, %v465
  %v485 = vsel %vm104, %v423, %v466
  %v489 = vsel %vm104, %v401, %v468
  %v493 = vsel %vm104, %v402, %v469
  %v497 = vsel %vm104, %v444, %v471
  %v500 = vsel %vm104, %v446, %v472
  %v502 = vld [vmem:[%s4] sm:$0xf]
  %v504 = vsel %vm325, %v502, 0
  %v507 = vsel %vm104, %v458, 0
  %v509 = vsel %vm104, %v460, 0
  %511 = vmatprep.subr.bf16.mxu0 %v478
  %512 = vmatpush1.bf16.msra.mxu0 %v474
  %513 = vmatprep.subr.bf16.mxu0 %v485
  %514 = vmatpush1.bf16.msra.mxu0 %v481
  %515 = vmatprep.subr.bf16.mxu0 %v493
  %516 = vmatpush1.bf16.msra.mxu0 %v489
  %517 = vmatprep.subr.bf16.mxu0 %v500
  %518 = vmatpush1.bf16.msra.mxu0 %v497
  %519 = vmatprep.subr.bf16.mxu0 %v509
  %520 = vmatpush1.bf16.msra.mxu0 %v507
  %521 = vmatprep.subr.bf16.mxu0 0
  %522 = vmatpush1.bf16.msra.mxu0 0
  %523 = vmatprep.subr.bf16.mxu0 0
  %524 = vmatpush1.bf16.msra.mxu0 0
  %525 = vmatprep.subr.bf16.mxu0 0
  %526 = vmatpush1.bf16.msra.mxu0 0
  %527 = vmatprep.subr.bf16.mxu0 0
  %528 = vmatpush1.bf16.msra.mxu0 0
  %529 = vmatprep.subr.bf16.mxu0 0
  %530 = vmatpush1.bf16.msra.mxu0 0
  %531 = vmatprep.subr.bf16.mxu0 0
  %532 = vmatpush1.bf16.msra.mxu0 0
  %533 = vmatprep.subr.bf16.mxu0 0
  %534 = vmatpush1.bf16.msra.mxu0 0
  %535 = vmatprep.subr.bf16.mxu0 0
  %536 = vmatpush1.bf16.msra.mxu0 0
  %537 = vmatprep.subr.bf16.mxu0 0
  %538 = vmatpush1.bf16.msra.mxu0 0
  %539 = vmatprep.subr.bf16.mxu0 0
  %540 = vmatpush1.bf16.msra.mxu0 0
  %541 = vmatprep.subr.bf16.mxu0 0
  %542 = vmatpush1.bf16.msra.mxu0 0
  %543 = vmatprep.mubr.bf16.mxu0 0
  %544 = vmatmul.mubr.bf16.gmra.mrb[0].mxu0 %v504
  %v545 = vpop.f32.mrb[0].mxu0
  %v546 = vadd.f32 0.0, %v545
  %v547 = vpop.f32.mrb[0].mxu0
  %v548 = vadd.f32 0.0, %v547
  %v549 = vpop.f32.mrb[0].mxu0
  %v550 = vpop.f32.mrb[0].mxu0
  %551 = vdwg.mxu0
  %s552 = scalar_lea.vmem %s5, 16
  %v553 = vld [vmem:[%s552] sm:$0xff]
  %555 = vset.pattern.permute.xlu0 0
  %556 = vperm.xlu0 %555, %v553
  %v557 = vpop.permute.xlu0 %556
  %v559 = vmul.f32 %v546, %v557
  %v560 = vmul.f32 %v548, %v557
  %s561 = scalar_lea.vmem %s6, 16
  %v562 = vld [vmem:[%s561] sm:$0xff]
  %564 = vset.pattern.permute.xlu0 0
  %565 = vperm.xlu0 %564, %v562
  %v566 = vpop.permute.xlu0 %565
  %v568 = vadd.f32 %v559, %v566
  %v569 = vadd.f32 %v560, %v566
  %vm570 = vcmp.ge.f32.partialorder %v568, 0.0
  %vm571 = vcmp.ge.f32.partialorder %v569, 0.0
  %v572 = vmul.f32 %v568, 0.01
  %v573 = vmul.f32 %v569, 0.01
  %v574 = vsel %vm570, %v568, %v572
  %v575 = vsel %vm571, %v569, %v573
  %v576 = vadd.f32 %v211, %v574
  %v577 = vadd.f32 %v212, %v575
  %578 = vst [vmem:[%s7] sm:$0xff] %v576
  %579 = vst [vmem:[%s7 + $0x8] sm:$0xff] %v577
  // Predicated region
  $region30: #{conv_res_block_forward.1} parent=0 // pred_check
    _
  $region31: #{conv_res_block_forward.1} parent=0 // pred_check_branch
    %581 = sbr.rel (0) target = $region33
  $region32: #{conv_res_block_forward.1} parent=0 // pred_region
    _
  $region33: #{conv_res_block_forward.1} parent=0 // pred_fallthru
    _
  // Predicated region
  $region34: #{conv_res_block_forward.1} parent=0 // pred_check
    _
  $region35: #{conv_res_block_forward.1} parent=0 // pred_check_branch
    %583 = sbr.rel (0) target = $region37
  $region36: #{conv_res_block_forward.1} parent=0 // pred_region
    _
  $region37: #{conv_res_block_forward.1} parent=0 // pred_fallthru
    _

</llo_original>
